<compile_context>
chip_gen: v6e
topology: v6e:2x2x1
jax: 0.10.0
libtpu: 0.0.40
codegen_flags: <defaults>
</compile_context>

<pallas_src>
import jax
import jax.numpy as jnp
from jax.experimental import pallas as pl
from jax.experimental.pallas import tpu as pltpu


# ---------------------------------------------------------------------------
# Config (mirrors the cfg fields used in LinearClassifier.__init__)
# ---------------------------------------------------------------------------
class Cfg:
    dim_z = 32          # latent dim
    args_dim = 7        # module uses args_dim + 1 = 8
    n_args = 4
    n_commands = 6
    max_total_len = 8


def num_classes_of(cfg):
    args_dim = cfg.args_dim + 1
    return cfg.max_total_len * (cfg.n_commands + cfg.n_args * args_dim)


def _round_up(x, m):
    return ((x + m - 1) // m) * m


def _tensorcores_per_chip():
    # v7x has 2 TensorCores per chip sharing the grid along "parallel" axes.
    try:
        kind = jax.devices()[0].device_kind.lower()
    except Exception:
        return 1
    return 2 if "v7" in kind else 1


# ---------------------------------------------------------------------------
# Pallas kernel: one lane-dense matmul (mean already folded into W_eff) + bias
# ---------------------------------------------------------------------------
def _classifier_kernel(z_ref, w_ref, b_ref, out_ref):
    # z_ref:   (TB, K)     VMEM  (one batch tile, K = S*D, lane-dense)
    # w_ref:   (K, Cpad)   VMEM  (W_eff = tile(W, (S,1)) / S, resident)
    # b_ref:   (1, Cpad)   VMEM  (f32, resident)
    # out_ref: (TB, Cpad)  VMEM  (Cpad % 128 == 0 -> unmasked stores)
    logits = jnp.dot(z_ref[...], w_ref[...],
                     preferred_element_type=jnp.float32)           # MXU, f32 acc
    out_ref[...] = (logits + b_ref[...]).astype(out_ref.dtype)


def classifier_forward(z, weight_t, bias, cfg, *, batch_tile=2048,
                       out_dtype=None, use_bf16_matmul=False):
    """Pallas-backed forward. z: (B, S, dim_z). Returns (cmd_logits, args_logits).

    batch_tile=2048 (f32): ~11 MiB double-buffered VMEM -> safe on v5e/v6e/v7x.
    On v5e/v6e (128 MiB VMEM) it can be raised to 4096-8192 for very large B.
    """
    B, S, D = z.shape
    C = num_classes_of(cfg)
    assert weight_t.shape == (D, C)
    K = S * D
    out_dtype = jnp.dtype(out_dtype) if out_dtype is not None else jnp.dtype(jnp.float32)

    # --- pad the class (lane) dimension to a multiple of 128 ----------------
    Cpad = _round_up(C, 128)                                        # 304 -> 384
    w_pad = jnp.pad(weight_t, ((0, 0), (0, Cpad - C))) if Cpad != C else weight_t
    b_pad = jnp.pad(bias, (0, Cpad - C)) if Cpad != C else bias
    b_pad = b_pad.astype(jnp.float32).reshape(1, Cpad)

    # --- fold the seq-mean into the matmul -----------------------------------
    # z_flat[b] = concat_s z[b, s, :]  ;  W_eff = tile(W, (S,1)) / S
    # => z_flat @ W_eff == mean_s(z[b, s, :]) @ W       (same math, one MXU pass)
    if use_bf16_matmul:
        mm_dtype = jnp.bfloat16
    else:
        mm_dtype = jnp.bfloat16 if z.dtype == jnp.bfloat16 else jnp.float32
    w_eff = (jnp.tile(w_pad, (S, 1)).astype(jnp.float32) / S).astype(mm_dtype)
    z_flat = z.reshape(B, K).astype(mm_dtype)                      # pure reshape

    # --- batch tiling (adaptive tile, no large fixed-tile batch pad) --------
    min_tiles = 2 if (_tensorcores_per_chip() >= 2 and B >= 16) else 1
    n_tiles = max(pl.cdiv(B, batch_tile), min_tiles)
    if n_tiles == 1:
        tb, Bpad = B, B                                            # full-dim block, no pad
    else:
        tb = _round_up(pl.cdiv(B, n_tiles), 8)                     # sublane-aligned
        n_tiles = pl.cdiv(B, tb)
        Bpad = n_tiles * tb                                        # pads < 8*n_tiles rows
    if Bpad != B:
        z_flat = jnp.pad(z_flat, ((0, Bpad - B), (0, 0)))

    # --- scheduling hints -----------------------------------------------------
    cost = pl.CostEstimate(
        flops=2 * Bpad * K * Cpad,
        transcendentals=0,
        bytes_accessed=(Bpad * K * jnp.dtype(mm_dtype).itemsize
                        + K * Cpad * jnp.dtype(mm_dtype).itemsize
                        + Cpad * 4
                        + Bpad * Cpad * out_dtype.itemsize),
    )
    # Double-buffered tile footprint; raise scoped VMEM only as far as needed.
    vmem_est = 2 * (tb * K * jnp.dtype(mm_dtype).itemsize
                    + tb * Cpad * out_dtype.itemsize
                    + K * Cpad * jnp.dtype(mm_dtype).itemsize
                    + Cpad * 4)
    vmem_limit = int(min(max(vmem_est + (8 << 20), 32 << 20), 96 << 20))

    flat_logits = pl.pallas_call(
        _classifier_kernel,
        out_shape=jax.ShapeDtypeStruct((Bpad, Cpad), out_dtype),
        grid_spec=pl.GridSpec(
            grid=(n_tiles,),
            in_specs=[
                pl.BlockSpec((tb, K), lambda i: (i, 0)),           # batch tile
                pl.BlockSpec((K, Cpad), lambda i: (0, 0)),         # W_eff resident
                pl.BlockSpec((1, Cpad), lambda i: (0, 0)),         # bias resident
            ],
            out_specs=pl.BlockSpec((tb, Cpad), lambda i: (i, 0)),
        ),
        compiler_params=pltpu.CompilerParams(
            dimension_semantics=("parallel",),                     # megacore / v7x 2 TCs
            vmem_limit_bytes=vmem_limit),
        cost_estimate=cost,
    )(z_flat, w_eff, b_pad)

    flat_logits = flat_logits[:B, :C]                              # drop B / C padding

    # Glue (pure reshapes / split), identical to the PyTorch tail:
    args_dim = cfg.args_dim + 1
    per_step = cfg.n_commands + cfg.n_args * args_dim
    logits = flat_logits.reshape(B, cfg.max_total_len, per_step)
    cmd_logits = logits[..., : cfg.n_commands]
    args_logits = logits[..., cfg.n_commands:].reshape(
        B, cfg.max_total_len, cfg.n_args, args_dim)
    return cmd_logits, args_logits


# ---------------------------------------------------------------------------
# Pure-JAX reference for a sanity check
# ---------------------------------------------------------------------------
def classifier_forward_ref(z, weight_t, bias, cfg):
    z_mean = jnp.mean(z, axis=1)
    flat = z_mean @ weight_t + bias
    args_dim = cfg.args_dim + 1
    per_step = cfg.n_commands + cfg.n_args * args_dim
    logits = flat.reshape(z.shape[0], cfg.max_total_len, per_step)
    return (logits[..., : cfg.n_commands],
            logits[..., cfg.n_commands:].reshape(
                z.shape[0], cfg.max_total_len, cfg.n_args, args_dim))


if __name__ == "__main__":
    cfg = Cfg()
    B, S, D = 2, 8, cfg.dim_z
    C = num_classes_of(cfg)

    key = jax.random.PRNGKey(0)
    kz, kw, kb = jax.random.split(key, 3)
    z = jax.random.normal(kz, (B, S, D), dtype=jnp.float32)
    # nn.Linear(dim_z, num_classes): weight (C, D), bias (C,). Store transposed.
    weight_t = (jax.random.normal(kw, (D, C), dtype=jnp.float32) * 0.02)
    bias = (jax.random.normal(kb, (C,), dtype=jnp.float32) * 0.01)

    cmd_logits, args_logits = classifier_forward(z, weight_t, bias, cfg)
    jax.block_until_ready((cmd_logits, args_logits))

    cmd_ref, args_ref = classifier_forward_ref(z, weight_t, bias, cfg)
    assert cmd_logits.shape == (B, cfg.max_total_len, cfg.n_commands)
    assert args_logits.shape == (B, cfg.max_total_len, cfg.n_args, cfg.args_dim + 1)
    # Folded mean changes only f32 summation order vs. the reference.
    assert jnp.allclose(cmd_logits, cmd_ref, atol=1e-5)
    assert jnp.allclose(args_logits, args_ref, atol=1e-5)

    print("KERNEL_OK")
</pallas_src>

<mosaic_0001>
module attributes {stable_mosaic.version = 11 : i64} {
  func.func @_classifier_kernel(%arg0: i32, %arg1: memref<2x256xf32, #tpu.memory_space<vmem>>, %arg2: memref<256x384xf32, #tpu.memory_space<vmem>>, %arg3: memref<1x384xf32, #tpu.memory_space<vmem>>, %arg4: memref<2x384xf32, #tpu.memory_space<vmem>>) attributes {dimension_semantics = [#tpu.dimension_semantics<parallel>], iteration_bounds = array<i64: 1>, scalar_prefetch = 0 : i64, scratch_operands = 0 : i64, tpu.core_type = #tpu.core_type<tc>, window_params = [{transform_indices = @transform_0, window_bounds = array<i64: 2, 256>}, {pipeline_mode = #tpu.pipeline_mode<synchronous>, transform_indices = @transform_1, window_bounds = array<i64: 256, 384>}, {pipeline_mode = #tpu.pipeline_mode<synchronous>, transform_indices = @transform_2, window_bounds = array<i64: 1, 384>}, {transform_indices = @transform_3, window_bounds = array<i64: 2, 384>}]} {
    %c0 = arith.constant 0 : index
    %c0_0 = arith.constant 0 : index
    %0 = vector.load %arg1[%c0, %c0_0] : memref<2x256xf32, #tpu.memory_space<vmem>>, vector<2x256xf32>
    %c0_1 = arith.constant 0 : index
    %c0_2 = arith.constant 0 : index
    %1 = vector.load %arg2[%c0_1, %c0_2] : memref<256x384xf32, #tpu.memory_space<vmem>>, vector<256x384xf32>
    %cst = arith.constant dense<0.000000e+00> : vector<2x384xf32>
    %2 = tpu.matmul %0, %1, %cst {dimension_numbers = #tpu.dot_dimension_numbers<[1], [0], [0], [1], [0, 0, 1, 1], [], []>} : vector<2x256xf32>, vector<256x384xf32>, vector<2x384xf32> -> vector<2x384xf32>
    %c0_3 = arith.constant 0 : index
    %c0_4 = arith.constant 0 : index
    %3 = vector.load %arg3[%c0_3, %c0_4] : memref<1x384xf32, #tpu.memory_space<vmem>>, vector<1x384xf32>
    %4 = vector.broadcast %3 : vector<1x384xf32> to vector<2x384xf32>
    %5 = arith.addf %2, %4 : vector<2x384xf32>
    %c0_5 = arith.constant 0 : index
    %c0_6 = arith.constant 0 : index
    %6 = vector.load %arg4[%c0_5, %c0_6] : memref<2x384xf32, #tpu.memory_space<vmem>>, vector<2x384xf32>
    tpu.vector_store %arg4[%c0_5, %c0_6], %5 {strides = array<i32>} : memref<2x384xf32, #tpu.memory_space<vmem>>, vector<2x384xf32>,
    return
  }
  func.func @transform_0(%arg0: i32) -> (i32, i32) {
    %c0_i32 = arith.constant 0 : i32
    %c0_i32_0 = arith.constant 0 : i32
    return %arg0, %c0_i32 : i32, i32
  }
  func.func @transform_1(%arg0: i32) -> (i32, i32) {
    %c0_i32 = arith.constant 0 : i32
    %c0_i32_0 = arith.constant 0 : i32
    %c0_i32_1 = arith.constant 0 : i32
    return %c0_i32, %c0_i32_0 : i32, i32
  }
  func.func @transform_2(%arg0: i32) -> (i32, i32) {
    %c0_i32 = arith.constant 0 : i32
    %c0_i32_0 = arith.constant 0 : i32
    %c0_i32_1 = arith.constant 0 : i32
    return %c0_i32, %c0_i32_0 : i32, i32
  }
  func.func @transform_3(%arg0: i32) -> (i32, i32) {
    %c0_i32 = arith.constant 0 : i32
    %c0_i32_0 = arith.constant 0 : i32
    return %arg0, %c0_i32 : i32, i32
  }
}

</mosaic_0001>

<llo_original>
// kernel: tpu_custom_call.1
$region0: #{tpu_custom_call.1}
  #allocation0 [shape = 'u32[]', space=smem, size = 0x4, offset = 0x4, fixed_abs, tag = 'smem constant byte address 0x4 - core index']
  #allocation1 [shape = 'u32[144,128]{1,0:T(1,128)}', space=vmem, size = 0x12000, scoped, tag = 'internal scratch']
  %s0 = inlined_call_operand.hbm [shape: f32[2,256], index: 0, kind: input, shape index: {}]
  %s1 = inlined_call_operand.hbm [shape: f32[256,384], index: 1, kind: input, shape index: {}]
  %s2 = inlined_call_operand.vmem [shape: f32[1,384], index: 2, kind: input, shape index: {}]
  %s3 = inlined_call_operand.hbm [shape: f32[2,384], index: 3, kind: output, shape index: {}]
  %s4 = sld [smem:[#allocation0]]
  $region30: #{tpu_custom_call.1} parent=0
    _
  %s6 = ssub.s32 1, %s4
  %s7 = scalar_select 0, %s6, %s4
  $region1: #{tpu_custom_call.1} parent=0
    #allocation2 [shape = 'u8[2048]{0}', space=vmem, size = 0x800, scoped, tag = 'input window, operand 0, single buffered']
    #allocation3 [shape = 's32[1]{0}', space=sflag, size = 0x4, scoped, tag = 'scoped memory for tpu_custom_call.1']
    #allocation4 [shape = 's32[1]{0}', space=sflag, size = 0x4, scoped, tag = 'scoped memory for tpu_custom_call.1']
    #allocation5 [shape = 'u8[393216]{0}', space=vmem, size = 0x60000, scoped, tag = 'input window, operand 1, single buffered']
    #allocation6 [shape = 's32[1]{0}', space=sflag, size = 0x4, scoped, tag = 'scoped memory for tpu_custom_call.1']
    #allocation7 [shape = 'u8[3072]{0}', space=vmem, size = 0xc00, scoped, tag = 'output window, operand 0, single buffered']
    %8 = vsyncpa [#allocation3], 0
    %9 = vsyncpa [#allocation6], 0
    %10 = vsyncpa [#allocation4], 0
    // Predicated region
    $region2: #{tpu_custom_call.1} parent=1 // pred_check
      _
    $region3: #{tpu_custom_call.1} parent=1 // pred_check_branch
      %12 = sbr.rel (0) target = $region5
    $region4: #{tpu_custom_call.1} parent=1 // pred_region
      %s14 = ssub.s32 64, 64
      %15 = vsyncadd [#allocation3], %s14
      %s17 = sshll.u32 [#allocation2], 4
      %s18 = int_to_ptr.vmem [resolvable:$true] %s17
      %20 = dma.hbm_to_vmem [thread:$0]  %s0, 64, %s18, [#allocation3]
    $region5: #{tpu_custom_call.1} parent=1 // pred_fallthru
      _
    // Predicated region
    $region6: #{tpu_custom_call.1} parent=1 // pred_check
      _
    $region7: #{tpu_custom_call.1} parent=1 // pred_check_branch
      %22 = sbr.rel (0) target = $region9
    $region8: #{tpu_custom_call.1} parent=1 // pred_region
      %s24 = ssub.s32 12288, 12288
      %25 = vsyncadd [#allocation6], %s24
      %s26 = sshll.u32 [#allocation5], 4
      %s27 = int_to_ptr.vmem [resolvable:$true] %s26
      %32 = dma.hbm_to_vmem [thread:$0]  %s1, 12288, %s27, [#allocation6], 384, 384, 24
    $region9: #{tpu_custom_call.1} parent=1 // pred_fallthru
      _
    // Predicated region
    $region10: #{tpu_custom_call.1} parent=1 // pred_check
      _
    $region11: #{tpu_custom_call.1} parent=1 // pred_check_branch
      %34 = sbr.rel (0) target = $region13
    $region12: #{tpu_custom_call.1} parent=1 // pred_region
      _
    $region13: #{tpu_custom_call.1} parent=1 // pred_fallthru
      _
    // Predicated region
    $region14: #{tpu_custom_call.1} parent=1 // pred_check
      _
    $region15: #{tpu_custom_call.1} parent=1 // pred_check_branch
      %36 = sbr.rel (0) target = $region17
    $region16: #{tpu_custom_call.1} parent=1 // pred_region
      %37 = dma.done [#allocation3], 64
    $region17: #{tpu_custom_call.1} parent=1 // pred_fallthru
      _
    // Predicated region
    $region18: #{tpu_custom_call.1} parent=1 // pred_check
      _
    $region19: #{tpu_custom_call.1} parent=1 // pred_check_branch
      %39 = sbr.rel (0) target = $region21
    $region20: #{tpu_custom_call.1} parent=1 // pred_region
      %40 = dma.done [#allocation6], 12288
    $region21: #{tpu_custom_call.1} parent=1 // pred_fallthru
      _
    %v41 = vld [vmem:[#allocation2] sm:$0xf]
    %v42 = vld [vmem:[#allocation5] sm:$0xff]
    %v43 = vld [vmem:[#allocation5 + $0x8] sm:$0xff]
    %v44 = vld [vmem:[#allocation5 + $0x10] sm:$0xff]
    %v45 = vld [vmem:[#allocation5 + $0x18] sm:$0xff]
    %v46 = vld [vmem:[#allocation5 + $0x20] sm:$0xff]
    %v47 = vld [vmem:[#allocation5 + $0x28] sm:$0xff]
    %v48 = vld [vmem:[#allocation5 + $0x30] sm:$0xff]
    %v49 = vld [vmem:[#allocation5 + $0x38] sm:$0xff]
    %v50 = vld [vmem:[#allocation5 + $0x40] sm:$0xff]
    %v51 = vld [vmem:[#allocation5 + $0x48] sm:$0xff]
    %v52 = vld [vmem:[#allocation5 + $0x50] sm:$0xff]
    %v53 = vld [vmem:[#allocation5 + $0x58] sm:$0xff]
    %v54 = vld [vmem:[#allocation5 + $0x60] sm:$0xff]
    %v55 = vld [vmem:[#allocation5 + $0x68] sm:$0xff]
    %v56 = vld [vmem:[#allocation5 + $0x70] sm:$0xff]
    %v57 = vld [vmem:[#allocation5 + $0x78] sm:$0xff]
    %v58 = vld [vmem:[#allocation5 + $0x80] sm:$0xff]
    %v59 = vld [vmem:[#allocation5 + $0x88] sm:$0xff]
    %v60 = vld [vmem:[#allocation5 + $0x90] sm:$0xff]
    %v61 = vld [vmem:[#allocation5 + $0x98] sm:$0xff]
    %v62 = vld [vmem:[#allocation5 + $0xa0] sm:$0xff]
    %v63 = vld [vmem:[#allocation5 + $0xa8] sm:$0xff]
    %v64 = vld [vmem:[#allocation5 + $0xb0] sm:$0xff]
    %v65 = vld [vmem:[#allocation5 + $0xb8] sm:$0xff]
    %v66 = vld [vmem:[#allocation5 + $0xc0] sm:$0xff]
    %v67 = vld [vmem:[#allocation5 + $0xc8] sm:$0xff]
    %v68 = vld [vmem:[#allocation5 + $0xd0] sm:$0xff]
    %v69 = vld [vmem:[#allocation5 + $0xd8] sm:$0xff]
    %v70 = vld [vmem:[#allocation5 + $0xe0] sm:$0xff]
    %v71 = vld [vmem:[#allocation5 + $0xe8] sm:$0xff]
    %v72 = vld [vmem:[#allocation5 + $0xf0] sm:$0xff]
    %v73 = vld [vmem:[#allocation5 + $0xf8] sm:$0xff]
    %v74 = vld [vmem:[#allocation5 + $0x100] sm:$0xff]
    %v75 = vld [vmem:[#allocation5 + $0x108] sm:$0xff]
    %v76 = vld [vmem:[#allocation5 + $0x110] sm:$0xff]
    %v77 = vld [vmem:[#allocation5 + $0x118] sm:$0xff]
    %v78 = vld [vmem:[#allocation5 + $0x120] sm:$0xff]
    %v79 = vld [vmem:[#allocation5 + $0x128] sm:$0xff]
    %v80 = vld [vmem:[#allocation5 + $0x130] sm:$0xff]
    %v81 = vld [vmem:[#allocation5 + $0x138] sm:$0xff]
    %v82 = vld [vmem:[#allocation5 + $0x140] sm:$0xff]
    %v83 = vld [vmem:[#allocation5 + $0x148] sm:$0xff]
    %v84 = vld [vmem:[#allocation5 + $0x150] sm:$0xff]
    %v85 = vld [vmem:[#allocation5 + $0x158] sm:$0xff]
    %v86 = vld [vmem:[#allocation5 + $0x160] sm:$0xff]
    %v87 = vld [vmem:[#allocation5 + $0x168] sm:$0xff]
    %v88 = vld [vmem:[#allocation5 + $0x170] sm:$0xff]
    %v89 = vld [vmem:[#allocation5 + $0x178] sm:$0xff]
    %v90 = vld [vmem:[#allocation5 + $0x180] sm:$0xff]
    %v91 = vld [vmem:[#allocation5 + $0x188] sm:$0xff]
    %v92 = vld [vmem:[#allocation5 + $0x190] sm:$0xff]
    %v93 = vld [vmem:[#allocation5 + $0x198] sm:$0xff]
    %v94 = vld [vmem:[#allocation5 + $0x1a0] sm:$0xff]
    %v95 = vld [vmem:[#allocation5 + $0x1a8] sm:$0xff]
    %v96 = vld [vmem:[#allocation5 + $0x1b0] sm:$0xff]
    %v97 = vld [vmem:[#allocation5 + $0x1b8] sm:$0xff]
    %v98 = vld [vmem:[#allocation5 + $0x1c0] sm:$0xff]
    %v99 = vld [vmem:[#allocation5 + $0x1c8] sm:$0xff]
    %v100 = vld [vmem:[#allocation5 + $0x1d0] sm:$0xff]
    %v101 = vld [vmem:[#allocation5 + $0x1d8] sm:$0xff]
    %v102 = vld [vmem:[#allocation5 + $0x1e0] sm:$0xff]
    %v103 = vld [vmem:[#allocation5 + $0x1e8] sm:$0xff]
    %v104 = vld [vmem:[#allocation5 + $0x1f0] sm:$0xff]
    %v105 = vld [vmem:[#allocation5 + $0x1f8] sm:$0xff]
    %v106 = vld [vmem:[#allocation5 + $0x200] sm:$0xff]
    %v107 = vld [vmem:[#allocation5 + $0x208] sm:$0xff]
    %v108 = vld [vmem:[#allocation5 + $0x210] sm:$0xff]
    %v109 = vld [vmem:[#allocation5 + $0x218] sm:$0xff]
    %v110 = vld [vmem:[#allocation5 + $0x220] sm:$0xff]
    %v111 = vld [vmem:[#allocation5 + $0x228] sm:$0xff]
    %v112 = vld [vmem:[#allocation5 + $0x230] sm:$0xff]
    %v113 = vld [vmem:[#allocation5 + $0x238] sm:$0xff]
    %v114 = vld [vmem:[#allocation5 + $0x240] sm:$0xff]
    %v115 = vld [vmem:[#allocation5 + $0x248] sm:$0xff]
    %v116 = vld [vmem:[#allocation5 + $0x250] sm:$0xff]
    %v117 = vld [vmem:[#allocation5 + $0x258] sm:$0xff]
    %v118 = vld [vmem:[#allocation5 + $0x260] sm:$0xff]
    %v119 = vld [vmem:[#allocation5 + $0x268] sm:$0xff]
    %v120 = vld [vmem:[#allocation5 + $0x270] sm:$0xff]
    %v121 = vld [vmem:[#allocation5 + $0x278] sm:$0xff]
    %v122 = vld [vmem:[#allocation5 + $0x280] sm:$0xff]
    %v123 = vld [vmem:[#allocation5 + $0x288] sm:$0xff]
    %v124 = vld [vmem:[#allocation5 + $0x290] sm:$0xff]
    %v125 = vld [vmem:[#allocation5 + $0x298] sm:$0xff]
    %v126 = vld [vmem:[#allocation5 + $0x2a0] sm:$0xff]
    %v127 = vld [vmem:[#allocation5 + $0x2a8] sm:$0xff]
    %v128 = vld [vmem:[#allocation5 + $0x2b0] sm:$0xff]
    %v129 = vld [vmem:[#allocation5 + $0x2b8] sm:$0xff]
    %v130 = vld [vmem:[#allocation5 + $0x2c0] sm:$0xff]
    %v131 = vld [vmem:[#allocation5 + $0x2c8] sm:$0xff]
    %v132 = vld [vmem:[#allocation5 + $0x2d0] sm:$0xff]
    %v133 = vld [vmem:[#allocation5 + $0x2d8] sm:$0xff]
    %v134 = vld [vmem:[#allocation5 + $0x2e0] sm:$0xff]
    %v135 = vld [vmem:[#allocation5 + $0x2e8] sm:$0xff]
    %v136 = vld [vmem:[#allocation5 + $0x2f0] sm:$0xff]
    %v137 = vld [vmem:[#allocation5 + $0x2f8] sm:$0xff]
    %v138 = vld [vmem:[%s2] sm:$0x7]
    %v140 = vlaneseq
    %v141 = vshrl.u32 %v140, 7
    %v142 = vsub.s32 0, %v141
    %v143 = vrot.slane %v138, %v142
    %v144 = vlaneseq
    %v145 = vshrl.u32 %v144, 7
    %v146 = vsub.s32 1, %v145
    %v147 = vrot.slane %v138, %v146
    %v148 = vlaneseq
    %v149 = vshrl.u32 %v148, 7
    %v150 = vsub.s32 2, %v149
    %v151 = vrot.slane %v138, %v150
    %v157 = vunpack.c.l.s4 1983009808
    %v158 = vunpack.c.0.s8 %v157
    %v159 = vlaneseq
    %v160 = vshrl.u32 %v159, 7
    %v161 = vsub.s32 %v158, %v160
    %v162 = vrot.slane %v41, %v161
    %v163 = vcombine.high %v162, %v162
    %166 = vmatprep.subr.mxu0 %v88
    %167 = vmatpush1.msra.mxu0 %v87
    %168 = vmatprep.subr.mxu0 %v85
    %169 = vmatpush1.msra.mxu0 %v84
    %170 = vmatprep.subr.mxu0 %v82
    %171 = vmatpush1.msra.mxu0 %v81
    %172 = vmatprep.subr.mxu0 %v79
    %173 = vmatpush1.msra.mxu0 %v78
    %174 = vmatprep.subr.mxu0 %v76
    %175 = vmatpush1.msra.mxu0 %v75
    %176 = vmatprep.subr.mxu0 %v73
    %177 = vmatpush1.msra.mxu0 %v72
    %178 = vmatprep.subr.mxu0 %v70
    %179 = vmatpush1.msra.mxu0 %v69
    %180 = vmatprep.subr.mxu0 %v67
    %181 = vmatpush1.msra.mxu0 %v66
    %182 = vmatprep.subr.mxu0 %v64
    %183 = vmatpush1.msra.mxu0 %v63
    %184 = vmatprep.subr.mxu0 %v61
    %185 = vmatpush1.msra.mxu0 %v60
    %186 = vmatprep.subr.mxu0 %v58
    %187 = vmatpush1.msra.mxu0 %v57
    %188 = vmatprep.subr.mxu0 %v55
    %189 = vmatpush1.msra.mxu0 %v54
    %190 = vmatprep.subr.mxu0 %v52
    %191 = vmatpush1.msra.mxu0 %v51
    %192 = vmatprep.subr.mxu0 %v49
    %193 = vmatpush1.msra.mxu0 %v48
    %194 = vmatprep.subr.mxu0 %v46
    %195 = vmatpush1.msra.mxu0 %v45
    %196 = vmatprep.subr.mxu0 %v43
    %197 = vmatpush1.msra.mxu0 %v42
    %198 = vmatprep.subr.mxu0 %v136
    %199 = vmatpush2.msra.mxu0 %v135
    %200 = vmatprep.subr.mxu0 %v133
    %201 = vmatpush2.msra.mxu0 %v132
    %202 = vmatprep.subr.mxu0 %v130
    %203 = vmatpush2.msra.mxu0 %v129
    %204 = vmatprep.subr.mxu0 %v127
    %205 = vmatpush2.msra.mxu0 %v126
    %206 = vmatprep.subr.mxu0 %v124
    %207 = vmatpush2.msra.mxu0 %v123
    %208 = vmatprep.subr.mxu0 %v121
    %209 = vmatpush2.msra.mxu0 %v120
    %210 = vmatprep.subr.mxu0 %v118
    %211 = vmatpush2.msra.mxu0 %v117
    %212 = vmatprep.subr.mxu0 %v115
    %213 = vmatpush2.msra.mxu0 %v114
    %214 = vmatprep.subr.mxu0 %v112
    %215 = vmatpush2.msra.mxu0 %v111
    %216 = vmatprep.subr.mxu0 %v109
    %217 = vmatpush2.msra.mxu0 %v108
    %218 = vmatprep.subr.mxu0 %v106
    %219 = vmatpush2.msra.mxu0 %v105
    %220 = vmatprep.subr.mxu0 %v103
    %221 = vmatpush2.msra.mxu0 %v102
    %222 = vmatprep.subr.mxu0 %v100
    %223 = vmatpush2.msra.mxu0 %v99
    %224 = vmatprep.subr.mxu0 %v97
    %225 = vmatpush2.msra.mxu0 %v96
    %226 = vmatprep.subr.mxu0 %v94
    %227 = vmatpush2.msra.mxu0 %v93
    %228 = vmatprep.subr.mxu0 %v91
    %229 = vmatpush2.msra.mxu0 %v90
    %230 = vmatprep.mubr.f32.mxu0 %v163
    %231 = vmatmul.mubr.f32.gmra.mxu0 %v162
    %v232 = vpop.f32.mrf.mxu0
    %v233 = vadd.f32 %v143, %v232
    %v234 = vpop.f32.mrf.mxu0
    %v235 = vadd.f32 %v147, %v234
    %236 = vdwg.mxu0
    %237 = vmatprep.subr.mxu0 0.0
    %238 = vmatpush1.msra.mxu0 %v89
    %239 = vmatprep.subr.mxu0 0.0
    %240 = vmatpush1.msra.mxu0 %v86
    %241 = vmatprep.subr.mxu0 0.0
    %242 = vmatpush1.msra.mxu0 %v83
    %243 = vmatprep.subr.mxu0 0.0
    %244 = vmatpush1.msra.mxu0 %v80
    %245 = vmatprep.subr.mxu0 0.0
    %246 = vmatpush1.msra.mxu0 %v77
    %247 = vmatprep.subr.mxu0 0.0
    %248 = vmatpush1.msra.mxu0 %v74
    %249 = vmatprep.subr.mxu0 0.0
    %250 = vmatpush1.msra.mxu0 %v71
    %251 = vmatprep.subr.mxu0 0.0
    %252 = vmatpush1.msra.mxu0 %v68
    %253 = vmatprep.subr.mxu0 0.0
    %254 = vmatpush1.msra.mxu0 %v65
    %255 = vmatprep.subr.mxu0 0.0
    %256 = vmatpush1.msra.mxu0 %v62
    %257 = vmatprep.subr.mxu0 0.0
    %258 = vmatpush1.msra.mxu0 %v59
    %259 = vmatprep.subr.mxu0 0.0
    %260 = vmatpush1.msra.mxu0 %v56
    %261 = vmatprep.subr.mxu0 0.0
    %262 = vmatpush1.msra.mxu0 %v53
    %263 = vmatprep.subr.mxu0 0.0
    %264 = vmatpush1.msra.mxu0 %v50
    %265 = vmatprep.subr.mxu0 0.0
    %266 = vmatpush1.msra.mxu0 %v47
    %267 = vmatprep.subr.mxu0 0.0
    %268 = vmatpush1.msra.mxu0 %v44
    %269 = vmatprep.subr.mxu0 0.0
    %270 = vmatpush2.msra.mxu0 %v137
    %271 = vmatprep.subr.mxu0 0.0
    %272 = vmatpush2.msra.mxu0 %v134
    %273 = vmatprep.subr.mxu0 0.0
    %274 = vmatpush2.msra.mxu0 %v131
    %275 = vmatprep.subr.mxu0 0.0
    %276 = vmatpush2.msra.mxu0 %v128
    %277 = vmatprep.subr.mxu0 0.0
    %278 = vmatpush2.msra.mxu0 %v125
    %279 = vmatprep.subr.mxu0 0.0
    %280 = vmatpush2.msra.mxu0 %v122
    %281 = vmatprep.subr.mxu0 0.0
    %282 = vmatpush2.msra.mxu0 %v119
    %283 = vmatprep.subr.mxu0 0.0
    %284 = vmatpush2.msra.mxu0 %v116
    %285 = vmatprep.subr.mxu0 0.0
    %286 = vmatpush2.msra.mxu0 %v113
    %287 = vmatprep.subr.mxu0 0.0
    %288 = vmatpush2.msra.mxu0 %v110
    %289 = vmatprep.subr.mxu0 0.0
    %290 = vmatpush2.msra.mxu0 %v107
    %291 = vmatprep.subr.mxu0 0.0
    %292 = vmatpush2.msra.mxu0 %v104
    %293 = vmatprep.subr.mxu0 0.0
    %294 = vmatpush2.msra.mxu0 %v101
    %295 = vmatprep.subr.mxu0 0.0
    %296 = vmatpush2.msra.mxu0 %v98
    %297 = vmatprep.subr.mxu0 0.0
    %298 = vmatpush2.msra.mxu0 %v95
    %299 = vmatprep.subr.mxu0 0.0
    %300 = vmatpush2.msra.mxu0 %v92
    %301 = vmatprep.mubr.f32.mxu0 %v163
    %302 = vmatmul.mubr.f32.gmra.mxu0 %v162
    %v303 = vpop.f32.mrf.mxu0
    %v304 = vadd.f32 %v151, %v303
    %v305 = vpop.f32.mrf.mxu0
    %306 = vdwg.mxu0
    %v310 = vcombine.low %v233, %v235
    %v312 = vunpack.c.l.s4 1983009808
    %v313 = vunpack.c.0.s8 %v312
    %v314 = vlaneseq
    %v315 = vshrl.u32 %v314, 7
    %v316 = vsub.s32 %v313, %v315
    %v317 = vrot.slane %v310, %v316
    %v319 = vunpack.c.l.s4 1983009808
    %v320 = vunpack.c.0.s8 %v319
    %v321 = vlaneseq
    %v322 = vshrl.u32 %v321, 7
    %v323 = vsub.s32 %v320, %v322
    %v324 = vrot.slane %v304, %v323
    %v325 = vcombine.low %v317, %v324
    %327 = vst [vmem:[#allocation7] sm:$0x3f] %v325
    // Predicated region
    $region22: #{tpu_custom_call.1} parent=1 // pred_check
      _
    $region23: #{tpu_custom_call.1} parent=1 // pred_check_branch
      %329 = sbr.rel (0) target = $region25
    $region24: #{tpu_custom_call.1} parent=1 // pred_region
      %s331 = ssub.s32 96, 96
      %332 = vsyncadd [#allocation4], %s331
      %s334 = sshll.u32 [#allocation7], 4
      %s335 = int_to_ptr.vmem [resolvable:$true] %s334
      %337 = dma.vmem_to_hbm [thread:$0]  %s335, 96, %s3, [#allocation4]
    $region25: #{tpu_custom_call.1} parent=1 // pred_fallthru
      _
    // Predicated region
    $region26: #{tpu_custom_call.1} parent=1 // pred_check
      _
    $region27: #{tpu_custom_call.1} parent=1 // pred_check_branch
      %339 = sbr.rel (0) target = $region29
    $region28: #{tpu_custom_call.1} parent=1 // pred_region
      %340 = dma.done [#allocation4], 96
    $region29: #{tpu_custom_call.1} parent=1 // pred_fallthru
      _
    %341 = vsyncpa [#allocation3], 1
    %342 = vsyncpa [#allocation6], 1
    %343 = vsyncpa [#allocation4], 1

</llo_original>
